<compile_context>
chip_gen: v5e
topology: v5e:2x2
jax: 0.10.0
libtpu: 0.0.40
codegen_flags: <defaults>
</compile_context>

<pallas_src>
import functools

import jax
import jax.numpy as jnp
from jax.experimental import pallas as pl
from jax.experimental.pallas import tpu as pltpu


def _round_up(a, b):
    return (a + b - 1) // b * b


def norm_kernel(x_ref, alpha_ref, bias_ref, o_ref, *, eps, d_model):
    # One (tm, D) row tile: row-wise mean / unbiased std / affine, all in f32.
    x = x_ref[...].astype(jnp.float32)
    mean = jnp.mean(x, axis=-1, keepdims=True)
    xc = x - mean
    # Bessel-corrected variance (torch .std default): divide by D-1.
    var = jnp.sum(xc * xc, axis=-1, keepdims=True) * (1.0 / (d_model - 1))
    std = jnp.sqrt(var)
    # Exact reciprocal: kernel is HBM-bound, approx=True buys nothing here.
    inv = pl.reciprocal(std + eps, approx=False)
    y = alpha_ref[...].astype(jnp.float32) * xc * inv + bias_ref[...].astype(jnp.float32)
    o_ref[...] = y.astype(o_ref.dtype)


@functools.partial(jax.jit, static_argnames=("eps",))
def norm(x, alpha, bias, *, eps=1e-6):
    """x: (..., d_model) -> (..., d_model), matching the PyTorch Norm module."""
    *lead, D = x.shape
    N = 1
    for d in lead:
        N *= d
    x2d = x.reshape(N, D)

    in_itemsize = jnp.dtype(x.dtype).itemsize
    out_itemsize = in_itemsize                       # output keeps the input dtype
    # Sublane packing: 8 rows for 4-byte dtypes, 16 for bf16, 32 for 1-byte dtypes.
    sublane = max(8, 32 // in_itemsize)

    # ---- Generation-aware VMEM budget ----------------------------------------
    try:
        vmem_cap = int(pltpu.get_tpu_info().vmem_capacity_bytes)
    except Exception:
        vmem_cap = 64 * 1024 * 1024                  # conservative (v7x per-TC)
    vmem_budget = vmem_cap - (16 << 20)              # headroom for compiler scratch

    # ---- Byte-targeted row tile ----------------------------------------------
    # v7x (64 MiB VMEM, ~3.2 TB/s HBM): push toward 4 MiB per input tile.
    # v5e/v6e (128 MiB VMEM): ~2 MiB per tile already sits at ~85% of roofline.
    target_tile_bytes = (4 << 20) if vmem_cap <= (64 << 20) else (2 << 20)

    row_in_bytes = D * in_itemsize
    tm_target = max(sublane, _round_up(max(1, target_tile_bytes // row_in_bytes), sublane))

    # Per-row VMEM footprint: x double-buffered + out double-buffered + f32 temps.
    per_row_vmem = 2 * D * in_itemsize + 2 * D * out_itemsize + 4 * D * 4
    tm_max = max(sublane, (vmem_budget // per_row_vmem) // sublane * sublane)

    tm_eff = min(tm_target, tm_max, _round_up(N, sublane))
    # Megacore (v7x has 2 TCs): when N is small, split rows into >=2 grid steps.
    if N > sublane:
        tm_split = max(sublane, _round_up(pl.cdiv(N, 2), sublane))
        tm_eff = min(tm_eff, tm_split)
    tm_eff = max(sublane, _round_up(tm_eff, sublane))

    # No padding: partial last block is handled by Pallas (OOB writes masked;
    # garbage tail rows are safe because statistics are strictly row-local).
    grid = (pl.cdiv(N, tm_eff),)

    a2d = alpha.reshape(1, D).astype(jnp.float32)
    b2d = bias.reshape(1, D).astype(jnp.float32)

    # Exact VMEM request for this tile choice (+ slack), capped by the chip.
    vmem_bytes = (2 * tm_eff * D * in_itemsize       # x tiles, double-buffered
                  + 2 * tm_eff * D * out_itemsize    # out tiles, double-buffered
                  + 4 * tm_eff * D * 4               # f32 upcast / temporaries
                  + 4 * D * 4                        # alpha / bias (resident)
                  + (2 << 20))                       # slack
    vmem_bytes = max(vmem_bytes, 16 << 20)
    vmem_bytes = min(vmem_bytes, vmem_cap - (4 << 20))

    cost = pl.CostEstimate(
        flops=8 * N * D,                                         # sub/mul/add per element
        transcendentals=2 * N,                                   # sqrt + reciprocal per row
        bytes_accessed=N * D * (in_itemsize + out_itemsize) + 2 * D * 4,
    )

    out2d = pl.pallas_call(
        functools.partial(norm_kernel, eps=float(eps), d_model=D),
        out_shape=jax.ShapeDtypeStruct((N, D), x.dtype),
        grid_spec=pltpu.PrefetchScalarGridSpec(
            num_scalar_prefetch=0,
            grid=grid,
            in_specs=[
                pl.BlockSpec((tm_eff, D), lambda i: (i, 0)),     # x row tile
                pl.BlockSpec((1, D), lambda i: (0, 0)),          # alpha (tiny, resident)
                pl.BlockSpec((1, D), lambda i: (0, 0)),          # bias  (tiny, resident)
            ],
            out_specs=pl.BlockSpec((tm_eff, D), lambda i: (i, 0)),
        ),
        compiler_params=pltpu.CompilerParams(
            dimension_semantics=("parallel",),
            vmem_limit_bytes=int(vmem_bytes),
        ),
        cost_estimate=cost,
    )(x2d, a2d, b2d)

    return out2d.reshape(*lead, D)


if __name__ == "__main__":
    key = jax.random.PRNGKey(0)
    # Small but lane-dense shapes (d_model multiple of 128).
    B, S, d_model = 2, 8, 128
    eps = 1e-6

    kx, ka, kb = jax.random.split(key, 3)
    x = jax.random.normal(kx, (B, S, d_model), dtype=jnp.float32)
    # Module init is alpha=ones, bias=zeros; perturb to exercise the affine path.
    alpha = 1.0 + 0.1 * jax.random.normal(ka, (d_model,), dtype=jnp.float32)
    bias = 0.1 * jax.random.normal(kb, (d_model,), dtype=jnp.float32)

    out = norm(x, alpha, bias, eps=eps)
    out = jax.block_until_ready(out)

    # Reference in plain JAX, matching torch semantics (unbiased std, ddof=1).
    mean = x.mean(axis=-1, keepdims=True)
    std = jnp.std(x, axis=-1, keepdims=True, ddof=1)
    ref = alpha * (x - mean) / (std + eps) + bias

    assert out.shape == (B, S, d_model)
    assert jnp.allclose(out, ref, atol=1e-4, rtol=1e-4), "mismatch vs reference"

    print("KERNEL_OK")
</pallas_src>

<mosaic_0001>
module attributes {stable_mosaic.version = 11 : i64} {
  func.func @norm_kernel(%arg0: i32, %arg1: memref<8x128xf32, #tpu.memory_space<vmem>>, %arg2: memref<1x128xf32, #tpu.memory_space<vmem>>, %arg3: memref<1x128xf32, #tpu.memory_space<vmem>>, %arg4: memref<8x128xf32, #tpu.memory_space<vmem>>) attributes {dimension_semantics = [#tpu.dimension_semantics<parallel>], iteration_bounds = array<i64: 2>, scalar_prefetch = 0 : i64, scratch_operands = 0 : i64, tpu.core_type = #tpu.core_type<tc>, window_params = [{transform_indices = @transform_0, window_bounds = array<i64: 8, 128>}, {pipeline_mode = #tpu.pipeline_mode<synchronous>, transform_indices = @transform_1, window_bounds = array<i64: 1, 128>}, {pipeline_mode = #tpu.pipeline_mode<synchronous>, transform_indices = @transform_2, window_bounds = array<i64: 1, 128>}, {transform_indices = @transform_3, window_bounds = array<i64: 8, 128>}]} {
    %c0 = arith.constant 0 : index
    %c0_0 = arith.constant 0 : index
    %0 = vector.load %arg1[%c0, %c0_0] : memref<8x128xf32, #tpu.memory_space<vmem>>, vector<8x128xf32>
    %cst = arith.constant dense<0.000000e+00> : vector<8xf32>
    %1 = vector.multi_reduction <add>, %0, %cst [1] : vector<8x128xf32> to vector<8xf32>
    %2 = vector.shape_cast %1 : vector<8xf32> to vector<8x1xf32>
    %cst_1 = arith.constant 1.280000e+02 : f32
    %3 = vector.broadcast %cst_1 : f32 to vector<8x1xf32>
    %4 = arith.divf %2, %3 : vector<8x1xf32>
    %5 = vector.broadcast %4 : vector<8x1xf32> to vector<8x128xf32>
    %6 = arith.subf %0, %5 : vector<8x128xf32>
    %7 = arith.mulf %6, %6 : vector<8x128xf32>
    %cst_2 = arith.constant dense<0.000000e+00> : vector<8xf32>
    %8 = vector.multi_reduction <add>, %7, %cst_2 [1] : vector<8x128xf32> to vector<8xf32>
    %9 = vector.shape_cast %8 : vector<8xf32> to vector<8x1xf32>
    %cst_3 = arith.constant 0.00787401571 : f32
    %10 = vector.broadcast %cst_3 : f32 to vector<8x1xf32>
    %11 = arith.mulf %9, %10 : vector<8x1xf32>
    %12 = math.sqrt %11 : vector<8x1xf32>
    %cst_4 = arith.constant 9.99999997E-7 : f32
    %13 = vector.broadcast %cst_4 : f32 to vector<8x1xf32>
    %14 = arith.addf %12, %13 : vector<8x1xf32>
    %15 = tpu.reciprocal %14 : vector<8x1xf32> -> vector<8x1xf32>
    %c0_5 = arith.constant 0 : index
    %c0_6 = arith.constant 0 : index
    %16 = vector.load %arg2[%c0_5, %c0_6] : memref<1x128xf32, #tpu.memory_space<vmem>>, vector<1x128xf32>
    %17 = vector.broadcast %16 : vector<1x128xf32> to vector<8x128xf32>
    %18 = arith.mulf %17, %6 : vector<8x128xf32>
    %19 = vector.broadcast %15 : vector<8x1xf32> to vector<8x128xf32>
    %20 = arith.mulf %18, %19 : vector<8x128xf32>
    %c0_7 = arith.constant 0 : index
    %c0_8 = arith.constant 0 : index
    %21 = vector.load %arg3[%c0_7, %c0_8] : memref<1x128xf32, #tpu.memory_space<vmem>>, vector<1x128xf32>
    %22 = vector.broadcast %21 : vector<1x128xf32> to vector<8x128xf32>
    %23 = arith.addf %20, %22 : vector<8x128xf32>
    %c0_9 = arith.constant 0 : index
    %c0_10 = arith.constant 0 : index
    %24 = vector.load %arg4[%c0_9, %c0_10] : memref<8x128xf32, #tpu.memory_space<vmem>>, vector<8x128xf32>
    tpu.vector_store %arg4[%c0_9, %c0_10], %23 {strides = array<i32>} : memref<8x128xf32, #tpu.memory_space<vmem>>, vector<8x128xf32>,
    return
  }
  func.func @transform_0(%arg0: i32) -> (i32, i32) {
    %c0_i32 = arith.constant 0 : i32
    %c0_i32_0 = arith.constant 0 : i32
    return %arg0, %c0_i32 : i32, i32
  }
  func.func @transform_1(%arg0: i32) -> (i32, i32) {
    %c0_i32 = arith.constant 0 : i32
    %c0_i32_0 = arith.constant 0 : i32
    %c0_i32_1 = arith.constant 0 : i32
    return %c0_i32, %c0_i32_0 : i32, i32
  }
  func.func @transform_2(%arg0: i32) -> (i32, i32) {
    %c0_i32 = arith.constant 0 : i32
    %c0_i32_0 = arith.constant 0 : i32
    %c0_i32_1 = arith.constant 0 : i32
    return %c0_i32, %c0_i32_0 : i32, i32
  }
  func.func @transform_3(%arg0: i32) -> (i32, i32) {
    %c0_i32 = arith.constant 0 : i32
    %c0_i32_0 = arith.constant 0 : i32
    return %arg0, %c0_i32 : i32, i32
  }
}

</mosaic_0001>

<llo_original>
// kernel: norm.1
$region0: #{norm.1}
  #allocation0 [shape = 'u32[]', space=smem, size = 0x4, offset = 0x4, fixed_abs, tag = 'smem constant byte address 0x4 - core index']
  #allocation1 [shape = 'u32[72,128]{1,0:T(1,128)}', space=vmem, size = 0x9000, scoped, tag = 'internal scratch']
  %s0 = inlined_call_operand.hbm [shape: f32[16,128], index: 0, kind: input, shape index: {}]
  %s1 = inlined_call_operand.vmem [shape: f32[1,128], index: 1, kind: input, shape index: {}]
  %s2 = inlined_call_operand.vmem [shape: f32[1,128], index: 2, kind: input, shape index: {}]
  %s3 = inlined_call_operand.hbm [shape: f32[16,128], index: 3, kind: output, shape index: {}]
  %s4 = sld [smem:[#allocation0]]
  $region49: #{norm.1} parent=0
    _
  %s6 = ssub.s32 1, %s4
  %s7 = scalar_select 0, %s6, %s4
  $region1: #{norm.1} parent=0
    #allocation2 [shape = 'u8[8192]{0}', space=vmem, size = 0x2000, scoped, tag = 'input window, operand 0']
    #allocation3 [shape = 's32[2]{0}', space=sflag, size = 0x8, scoped, tag = 'scoped memory for norm.1']
    #allocation4 [shape = 's32[2]{0}', space=sflag, size = 0x8, scoped, tag = 'scoped memory for norm.1']
    #allocation5 [shape = 'u8[8192]{0}', space=vmem, size = 0x2000, scoped, tag = 'output window, operand 0']
    %8 = vsyncpa [#allocation3], 0
    %s9 = scalar_lea.sflag [#allocation3], 1
    %10 = vsyncpa %s9, 0
    %11 = vsyncpa [#allocation4], 0
    %s12 = scalar_lea.sflag [#allocation4], 1
    %13 = vsyncpa %s12, 0
    loop: start=0, step=1, limit=4
    $region2: #{norm.1} parent=1 // loop_pre_header
      _
    $region3: #{norm.1} parent=1 // loop_header
      %s15 = sphi 0, %s19
      %p16 = scmp.ge.s32.totalorder %s15, 4
      %s25 = sphi 0, %s27
      %s28 = sphi 0, %s25
      %s29 = sphi 0, %s28
      %s45 = sphi 0, %s29
      %s49 = sphi 0, %s49
      %s51 = sphi 0, %s49
      %s52 = sphi 0, %s51
      %s66 = sphi 0, %s52
      %s70 = sphi 0, %s70
      %s72 = sphi 0, %s70
      %s73 = sphi 0, %s72
      %s87 = sphi 0, %s73
      %s93 = sphi 0, %s95
      %s96 = sphi 0, %s93
      %s97 = sphi 0, %s96
      %s113 = sphi 0, %s97
    $region4: #{norm.1} parent=1 // loop_header_branch
      %18 = sbr.rel (%p16) target = $region8
    $region5: #{norm.1} parent=1 // loop_body
      %s20 = ssub.s32 %s15, 1
      %s21 = ssub.s32 %s15, 2
      %s22 = sadd.s32 %s15, 1
      %s23 = ssub.s32 %s15, %s22
      %p24 = scmp.eq.s32.totalorder %s23, 0
      %s26 = sadd.s32 %s25, 1
      %s27 = scalar_select %p24, %s25, %s26
      %p30 = pneg %p24
      %p31 = scmp.eq.s32.totalorder %s15, 1
      %p32 = por %p30, %p31
      %p33 = scmp.ne.s32.totalorder %s25, %s28
      %p34 = scmp.eq.s32.totalorder %s15, 0
      %p35 = por %p33, %p34
      %p36 = scmp.ne.s32.totalorder %s25, %s28
      %p37 = scmp.eq.s32.totalorder %s20, 1
      %p38 = por %p36, %p37
      %p39 = scmp.ne.s32.totalorder %s28, %s29
      %p40 = scmp.eq.s32.totalorder %s20, 0
      %p41 = por %p39, %p40
      %p42 = scmp.ne.s32.totalorder %s28, %s29
      %p43 = scmp.eq.s32.totalorder %s21, 1
      %p44 = por %p42, %p43
      %p46 = scmp.ne.s32.totalorder %s29, %s45
      %p47 = scmp.eq.s32.totalorder %s21, 0
      %p48 = por %p46, %p47
      %s50 = sadd.s32 %s49, 1
      %p53 = scmp.eq.s32.totalorder %s15, 1
      %p54 = scmp.ne.s32.totalorder %s49, %s51
      %p55 = scmp.eq.s32.totalorder %s15, 0
      %p56 = por %p54, %p55
      %p57 = scmp.ne.s32.totalorder %s49, %s51
      %p58 = scmp.eq.s32.totalorder %s20, 1
      %p59 = por %p57, %p58
      %p60 = scmp.ne.s32.totalorder %s51, %s52
      %p61 = scmp.eq.s32.totalorder %s20, 0
      %p62 = por %p60, %p61
      %p63 = scmp.ne.s32.totalorder %s51, %s52
      %p64 = scmp.eq.s32.totalorder %s21, 1
      %p65 = por %p63, %p64
      %p67 = scmp.ne.s32.totalorder %s52, %s66
      %p68 = scmp.eq.s32.totalorder %s21, 0
      %p69 = por %p67, %p68
      %s71 = sadd.s32 %s70, 1
      %p74 = scmp.eq.s32.totalorder %s15, 1
      %p75 = scmp.ne.s32.totalorder %s70, %s72
      %p76 = scmp.eq.s32.totalorder %s15, 0
      %p77 = por %p75, %p76
      %p78 = scmp.ne.s32.totalorder %s70, %s72
      %p79 = scmp.eq.s32.totalorder %s20, 1
      %p80 = por %p78, %p79
      %p81 = scmp.ne.s32.totalorder %s72, %s73
      %p82 = scmp.eq.s32.totalorder %s20, 0
      %p83 = por %p81, %p82
      %p84 = scmp.ne.s32.totalorder %s72, %s73
      %p85 = scmp.eq.s32.totalorder %s21, 1
      %p86 = por %p84, %p85
      %p88 = scmp.ne.s32.totalorder %s73, %s87
      %p89 = scmp.eq.s32.totalorder %s21, 0
      %p90 = por %p88, %p89
      %s91 = ssub.s32 %s15, %s22
      %p92 = scmp.eq.s32.totalorder %s91, 0
      %s94 = sadd.s32 %s93, 1
      %s95 = scalar_select %p92, %s93, %s94
      %p98 = pneg %p92
      %p99 = scmp.eq.s32.totalorder %s15, 1
      %p100 = por %p98, %p99
      %p101 = scmp.ne.s32.totalorder %s93, %s96
      %p102 = scmp.eq.s32.totalorder %s15, 0
      %p103 = por %p101, %p102
      %p104 = scmp.ne.s32.totalorder %s93, %s96
      %p105 = scmp.eq.s32.totalorder %s20, 1
      %p106 = por %p104, %p105
      %p107 = scmp.ne.s32.totalorder %s96, %s97
      %p108 = scmp.eq.s32.totalorder %s20, 0
      %p109 = por %p107, %p108
      %p110 = scmp.ne.s32.totalorder %s96, %s97
      %p111 = scmp.eq.s32.totalorder %s21, 1
      %p112 = por %p110, %p111
      %p114 = scmp.ne.s32.totalorder %s97, %s113
      %p115 = scmp.eq.s32.totalorder %s21, 0
      %p116 = por %p114, %p115
      %p117 = scmp.le.s32.totalorder 1, %s15
      %p118 = scmp.lt.s32.totalorder %s15, 3
      %p119 = pnand %p117, %p118
      %p120 = pneg %p119
      // Predicated region
      $region9: #{norm.1} parent=5 // pred_check
        _
      $region10: #{norm.1} parent=5 // pred_check_branch
        %122 = sbr.rel (%p119) target = $region12
      $region11: #{norm.1} parent=5 // pred_region
        %s123 = ssub.s32 %s15, 1
        // Predicated region
        $region13: #{norm.1} parent=11 // pred_check
          %p124 = pneg %p62
        $region14: #{norm.1} parent=11 // pred_check_branch
          %126 = sbr.rel (%p124) target = $region16
        $region15: #{norm.1} parent=11 // pred_region
          _
        $region16: #{norm.1} parent=11 // pred_fallthru
          _
        // Predicated region
        $region17: #{norm.1} parent=11 // pred_check
          %p127 = pneg %p83
        $region18: #{norm.1} parent=11 // pred_check_branch
          %129 = sbr.rel (%p127) target = $region20
        $region19: #{norm.1} parent=11 // pred_region
          _
        $region20: #{norm.1} parent=11 // pred_fallthru
          _
      $region12: #{norm.1} parent=5 // pred_fallthru
        _
      %p130 = scmp.lt.s32.totalorder %s15, 2
      // Predicated region
      $region21: #{norm.1} parent=5 // pred_check
        %p131 = pneg %p130
      $region22: #{norm.1} parent=5 // pred_check_branch
        %133 = sbr.rel (%p131) target = $region24
      $region23: #{norm.1} parent=5 // pred_region
        // Predicated region
        $region25: #{norm.1} parent=23 // pred_check
          %p134 = pneg %p35
        $region26: #{norm.1} parent=23 // pred_check_branch
          %136 = sbr.rel (%p134) target = $region28
        $region27: #{norm.1} parent=23 // pred_region
          %s137 = sand.u32 %s25, 1
          %s138 = scalar_lea.sflag [#allocation3], %s137
          %s139 = sand.u32 %s25, 1
          %s140 = smul.addr %s139, 8
          %s141 = scalar_lea.vmem [#allocation2], %s140
          %143 = vsyncadd %s138, 0
          %s144 = smul.addr %s15, 8
          %s145 = scalar_lea.hbm %s0, %s144
          %s147 = sshll.u32 %s145, 4
          %s148 = int_to_ptr.hbm [resolvable:$true] %s147
          %s149 = sshll.u32 %s141, 4
          %s150 = int_to_ptr.vmem [resolvable:$true] %s149
          %152 = dma.hbm_to_vmem [thread:$0]  %s148, 128, %s150, %s138
        $region28: #{norm.1} parent=23 // pred_fallthru
          _
      $region24: #{norm.1} parent=5 // pred_fallthru
        _
      %p153 = scmp.le.s32.totalorder 1, %s15
      %p154 = scmp.lt.s32.totalorder %s15, 3
      %p155 = pnand %p153, %p154
      %p156 = pneg %p155
      // Predicated region
      $region29: #{norm.1} parent=5 // pred_check
        _
      $region30: #{norm.1} parent=5 // pred_check_branch
        %158 = sbr.rel (%p155) target = $region32
      $region31: #{norm.1} parent=5 // pred_region
        %s159 = ssub.s32 %s15, 1
        %s160 = sand.u32 %s28, 1
        %s161 = scalar_lea.sflag [#allocation3], %s160
        %s162 = sand.u32 %s28, 1
        %s163 = smul.addr %s162, 8
        %s164 = scalar_lea.vmem [#allocation2], %s163
        // Predicated region
        $region33: #{norm.1} parent=31 // pred_check
          %p165 = pneg %p41
        $region34: #{norm.1} parent=31 // pred_check_branch
          %167 = sbr.rel (%p165) target = $region36
        $region35: #{norm.1} parent=31 // pred_region
          %169 = dma.done %s161, 128
        $region36: #{norm.1} parent=31 // pred_fallthru
          _
        %s170 = sand.u32 %s28, 1
        %s171 = scalar_lea.sflag [#allocation3], %s170
        %s172 = sand.u32 %s28, 1
        %s173 = smul.addr %s172, 8
        %s174 = scalar_lea.vmem [#allocation2], %s173
        %p175 = pneg %p41
        %p176 = pneg %p38
        %p177 = pneg %p62
        %p178 = pneg %p59
        %p179 = pneg %p83
        %p180 = pneg %p80
        %p181 = pneg %p109
        %p182 = pneg %p106
        %s183 = sand.u32 %s96, 1
        %s184 = scalar_lea.sflag [#allocation4], %s183
        %s185 = sand.u32 %s96, 1
        %s186 = smul.addr %s185, 8
        %s187 = scalar_lea.vmem [#allocation5], %s186
        %v188 = vld [vmem:[%s164] sm:$0xff]
        %189 = vadd.xlane.f32.xlu0 %v188
        %v190 = vpop.xlane.xlu0 %189
        %v191 = vrcp.pop 128.0
        %v192 = vmul.f32 128.0, %v191
        %v193 = vsub.f32 1.0, %v192
        %v194 = vmul.f32 %v191, %v193
        %v195 = vadd.f32 %v191, %v194
        %vm196 = vweird.f32 %v191
        %v197 = vsel %vm196, %v191, %v195
        %v198 = vmul.f32 %v190, %v197
        %v199 = vsub.f32 %v188, %v198
        %v200 = vmul.f32 %v199, %v199
        %201 = vadd.xlane.f32.xlu0 %v200
        %v202 = vpop.xlane.xlu0 %201
        %v203 = vmul.f32 %v202, 0.007874016
        %v204 = vrsqrt.pop %v203
        %v205 = vmul.f32 %v204, %v203
        %v206 = vmul.f32 %v205, %v204
        %v207 = vmul.f32 0.5, %v206
        %v208 = vsub.f32 1.5, %v207
        %v209 = vmul.f32 %v204, %v208
        %v210 = vmul.f32 %v203, %v209
        %vm211 = vcmp.eq.f32.partialorder %v203, inf
        %v212 = vsel %vm211, %v203, %v210
        %vm213 = vcmp.eq.f32.partialorder %v203, 0.0
        %v214 = vand.u32 %v203, 2147483648
        %v215 = vsel %vm213, %v214, %v212
        %v216 = vadd.f32 %v215, 1e-06
        %v217 = vrcp.pop %v216
        %v218 = vmul.f32 %v216, %v217
        %v219 = vsub.f32 1.0, %v218
        %v220 = vmul.f32 %v217, %v219
        %v221 = vadd.f32 %v217, %v220
        %vm222 = vweird.f32 %v216
        %vm223 = vweird.f32 %v217
        %vm224 = vmor %vm222, %vm223
        %v225 = vsel %vm224, %v217, %v221
        %v226 = vand.u32 2147483647, %v216
        %vm227 = vcmp.eq.f32.partialorder %v226, 8.507059e+37
        %v228 = vand.u32 %v216, 2147483648
        %v229 = vor.u32 1.1754944e-38, %v228
        %v230 = vsel %vm227, %v229, %v225
        %v231 = vld [vmem:[%s1] sm:$0x1]
        %v233 = vperm.slane %v231, 0
        %v235 = vmul.f32 %v233, %v199
        %v236 = vmul.f32 %v235, %v230
        %v237 = vld [vmem:[%s2] sm:$0x1]
        %v239 = vperm.slane %v237, 0
        %v241 = vadd.f32 %v236, %v239
        %242 = vst [vmem:[%s187] sm:$0xff] %v241
        %s243 = sand.u32 %s96, 1
        %s244 = scalar_lea.sflag [#allocation4], %s243
        %s245 = sand.u32 %s96, 1
        %s246 = smul.addr %s245, 8
        %s247 = scalar_lea.vmem [#allocation5], %s246
        // Predicated region
        $region37: #{norm.1} parent=31 // pred_check
          %p248 = pneg %p106
        $region38: #{norm.1} parent=31 // pred_check_branch
          %250 = sbr.rel (%p248) target = $region40
        $region39: #{norm.1} parent=31 // pred_region
          %252 = vsyncadd %s244, 0
          %s253 = smul.addr %s20, 8
          %s254 = scalar_lea.hbm %s3, %s253
          %s256 = sshll.u32 %s247, 4
          %s257 = int_to_ptr.vmem [resolvable:$true] %s256
          %s258 = sshll.u32 %s254, 4
          %s259 = int_to_ptr.hbm [resolvable:$true] %s258
          %261 = dma.vmem_to_hbm [thread:$0]  %s257, 128, %s259, %s244
        $region40: #{norm.1} parent=31 // pred_fallthru
          _
      $region32: #{norm.1} parent=5 // pred_fallthru
        _
      %p262 = scmp.le.s32.totalorder 2, %s15
      // Predicated region
      $region41: #{norm.1} parent=5 // pred_check
        %p263 = pneg %p262
      $region42: #{norm.1} parent=5 // pred_check_branch
        %265 = sbr.rel (%p263) target = $region44
      $region43: #{norm.1} parent=5 // pred_region
        %s266 = ssub.s32 %s15, 2
        // Predicated region
        $region45: #{norm.1} parent=43 // pred_check
          %p267 = pneg %p112
        $region46: #{norm.1} parent=43 // pred_check_branch
          %269 = sbr.rel (%p267) target = $region48
        $region47: #{norm.1} parent=43 // pred_region
          %s270 = sand.u32 %s97, 1
          %s271 = scalar_lea.sflag [#allocation4], %s270
          %s272 = sand.u32 %s97, 1
          %s273 = smul.addr %s272, 8
          %s274 = scalar_lea.vmem [#allocation5], %s273
          %276 = dma.done %s271, 128
        $region48: #{norm.1} parent=43 // pred_fallthru
          _
      $region44: #{norm.1} parent=5 // pred_fallthru
        _
    $region6: #{norm.1} parent=1 // loop_footer
      %s19 = sadd.s32 1, %s15
    $region7: #{norm.1} parent=1 // loop_footer_branch
      %14 = sbr.rel target = $region3
    $region8: #{norm.1} parent=1 // loop_exit
      _
    %277 = vsyncpa [#allocation3], 1
    %s278 = scalar_lea.sflag [#allocation3], 1
    %279 = vsyncpa %s278, 1
    %280 = vsyncpa [#allocation4], 1
    %s281 = scalar_lea.sflag [#allocation4], 1
    %282 = vsyncpa %s281, 1

</llo_original>
